<compile_context>
chip_gen: v5e
topology: v5e:2x2
jax: 0.10.0
libtpu: 0.0.40
codegen_flags: <defaults>
</compile_context>

<pallas_src>
import jax
import jax.numpy as jnp
from jax.experimental import pallas as pl
from jax.experimental.pallas import tpu as pltpu


# ---- static config (mirrors the `c` dict in the PyTorch module) ------------
CONFIG = {
    "layer_size": 32,
    "matrix_rank": 16,
    "log_normalize": True,
    "sqrt_normalize": False,
    "logits": True,
    "elu": False,
}


def _make_kernel(cfg):
    log_norm = bool(cfg["log_normalize"])
    sqrt_norm = bool(cfg["sqrt_normalize"])
    logits = bool(cfg["logits"])
    elu = bool(cfg["elu"])

    def kernel(x_ref, w_ref, o_ref):
        # x_ref: (TB, N, L)   w_ref: (L, R)   o_ref: (TB, N*N)
        tb, n, l = x_ref.shape
        r = w_ref.shape[1]

        x = x_ref[...].astype(jnp.float32)                    # (TB, N, L)
        if log_norm:
            x = jnp.log(jnp.abs(x) + 1.0)
        if sqrt_norm:
            x = jnp.sqrt(jnp.abs(x))

        # One big projection matmul on the MXU: (TB*N, L) @ (L, R).
        w = w_ref[...].astype(jnp.float32)                    # (L, R)
        p = jnp.dot(x.reshape(tb * n, l), w,
                    preferred_element_type=jnp.float32)       # (TB*N, R)

        if logits:
            # Exact sigmoid (exp -> EUP).  Keep the exact divide so numerics
            # stay tight vs the reference (approx reciprocal is ~2^-12).
            p = 1.0 / (1.0 + jnp.exp(-p))
        if elu:
            p = jnp.where(p > 0.0, p, jnp.exp(p) - 1.0)       # ELU(alpha=1)

        # torch.cdist(p, p): pairwise Euclidean distance via pairwise diffs
        # (VPU form).  Numerically safe (no cancellation), no transposes,
        # diagonal is exactly zero.
        p3 = p.reshape(tb, n, r)                              # (TB, N, R)
        diff = p3[:, :, None, :] - p3[:, None, :, :]          # (TB, N, N, R)
        diff = diff.reshape(tb, n * n, r)                     # merge non-minor dims
        d2 = jnp.sum(diff * diff, axis=-1)                    # (TB, N*N), >= 0
        # NOTE: sqrt(0) on the diagonal is forward-safe; a backward pass would
        # need an epsilon / diagonal mask.
        o_ref[...] = jnp.sqrt(d2)

    return kernel


def word_sense_forward(sentences, weights, cfg=CONFIG, batch_block=512):
    """sentences: (B, N, L) f32; weights: (L, R) f32 -> (B, N, N) f32."""
    B, N, L = sentences.shape
    L2, R = weights.shape
    assert L == L2 == cfg["layer_size"] and R == cfg["matrix_rank"]

    TB = min(B, batch_block)          # many batch elements per grid step
    grid = (pl.cdiv(B, TB),)

    kernel = _make_kernel(cfg)

    out_flat = pl.pallas_call(
        kernel,
        out_shape=jax.ShapeDtypeStruct((B, N * N), jnp.float32),
        grid_spec=pltpu.PrefetchScalarGridSpec(
            num_scalar_prefetch=0,
            grid=grid,
            in_specs=[
                pl.BlockSpec((TB, N, L), lambda b: (b, 0, 0)),
                pl.BlockSpec((L, R), lambda b: (0, 0)),
            ],
            out_specs=pl.BlockSpec((TB, N * N), lambda b: (b, 0)),
        ),
        compiler_params=pltpu.CompilerParams(
            dimension_semantics=("parallel",),      # shard grid across TCs (v7x)
            vmem_limit_bytes=32 * 1024 * 1024,      # headroom for TB=512 on v5e
        ),
    )(sentences, weights)

    return out_flat.reshape(B, N, N)


def reference_forward(sentences, weights, cfg=CONFIG):
    x = sentences.astype(jnp.float32)
    if cfg["log_normalize"]:
        x = jnp.log(jnp.abs(x) + 1.0)
    if cfg["sqrt_normalize"]:
        x = jnp.sqrt(jnp.abs(x))
    p = jnp.einsum("bnl,lr->bnr", x, weights.astype(jnp.float32),
                   precision=jax.lax.Precision.HIGHEST)
    if cfg["logits"]:
        p = 1.0 / (1.0 + jnp.exp(-p))
    if cfg["elu"]:
        p = jnp.where(p > 0.0, p, jnp.exp(p) - 1.0)
    diff = p[:, :, None, :] - p[:, None, :, :]
    return jnp.sqrt(jnp.sum(diff * diff, axis=-1))


if __name__ == "__main__":
    key = jax.random.PRNGKey(0)
    k_x, k_w = jax.random.split(key)

    B, N = 2, 8
    L, R = CONFIG["layer_size"], CONFIG["matrix_rank"]

    # deterministic synthetic inputs + uniform(-0.05, 0.05) weight init
    sentences = jax.random.normal(k_x, (B, N, L), dtype=jnp.float32)
    weights = jax.random.uniform(k_w, (L, R), minval=-0.05, maxval=0.05,
                                 dtype=jnp.float32)

    out = jax.block_until_ready(word_sense_forward(sentences, weights))
    ref = reference_forward(sentences, weights)

    assert out.shape == (B, N, N)
    err = float(jnp.max(jnp.abs(out - ref)))
    # 2e-3 absolute on O(0.1) distances: covers MXU-f32 vs XLA-HIGHEST and
    # (if run interpreted) default-precision dot, while catching real bugs.
    assert err < 2e-3, f"mismatch vs reference: max|diff|={err:.3e}"

    print("KERNEL_OK")
</pallas_src>

<mosaic_0001>
module attributes {stable_mosaic.version = 11 : i64} {
  func.func @kernel(%arg0: i32, %arg1: memref<2x8x32xf32, #tpu.memory_space<vmem>>, %arg2: memref<32x16xf32, #tpu.memory_space<vmem>>, %arg3: memref<2x64xf32, #tpu.memory_space<vmem>>) attributes {dimension_semantics = [#tpu.dimension_semantics<parallel>], iteration_bounds = array<i64: 1>, scalar_prefetch = 0 : i64, scratch_operands = 0 : i64, tpu.core_type = #tpu.core_type<tc>, window_params = [{transform_indices = @transform_0, window_bounds = array<i64: 2, 8, 32>}, {pipeline_mode = #tpu.pipeline_mode<synchronous>, transform_indices = @transform_1, window_bounds = array<i64: 32, 16>}, {transform_indices = @transform_2, window_bounds = array<i64: 2, 64>}]} {
    %c0 = arith.constant 0 : index
    %c0_0 = arith.constant 0 : index
    %c0_1 = arith.constant 0 : index
    %0 = vector.load %arg1[%c0, %c0_0, %c0_1] : memref<2x8x32xf32, #tpu.memory_space<vmem>>, vector<2x8x32xf32>
    %1 = math.absf %0 : vector<2x8x32xf32>
    %cst = arith.constant 1.000000e+00 : f32
    %2 = vector.broadcast %cst : f32 to vector<2x8x32xf32>
    %3 = arith.addf %1, %2 : vector<2x8x32xf32>
    %4 = math.log %3 : vector<2x8x32xf32>
    %c0_2 = arith.constant 0 : index
    %c0_3 = arith.constant 0 : index
    %5 = vector.load %arg2[%c0_2, %c0_3] : memref<32x16xf32, #tpu.memory_space<vmem>>, vector<32x16xf32>
    %6 = vector.shape_cast %4 : vector<2x8x32xf32> to vector<16x32xf32>
    %cst_4 = arith.constant dense<0.000000e+00> : vector<16x16xf32>
    %7 = tpu.matmul %6, %5, %cst_4 {dimension_numbers = #tpu.dot_dimension_numbers<[1], [0], [0], [1], [0, 0, 1, 1], [], []>} : vector<16x32xf32>, vector<32x16xf32>, vector<16x16xf32> -> vector<16x16xf32>
    %cst_5 = arith.constant 0.000000e+00 : f32
    %8 = vector.broadcast %cst_5 : f32 to vector<16x16xf32>
    %9 = arith.subf %8, %7 : vector<16x16xf32>
    %10 = math.exp %9 : vector<16x16xf32>
    %cst_6 = arith.constant 1.000000e+00 : f32
    %11 = vector.broadcast %cst_6 : f32 to vector<16x16xf32>
    %12 = arith.addf %11, %10 : vector<16x16xf32>
    %cst_7 = arith.constant 1.000000e+00 : f32
    %13 = vector.broadcast %cst_7 : f32 to vector<16x16xf32>
    %14 = arith.divf %13, %12 : vector<16x16xf32>
    %15 = vector.shape_cast %14 : vector<16x16xf32> to vector<2x8x16xf32>
    %16 = vector.shape_cast %15 : vector<2x8x16xf32> to vector<2x8x1x16xf32>
    %17 = vector.shape_cast %15 : vector<2x8x16xf32> to vector<2x1x8x16xf32>
    %18 = vector.broadcast %16 : vector<2x8x1x16xf32> to vector<2x8x8x16xf32>
    %19 = vector.broadcast %17 : vector<2x1x8x16xf32> to vector<2x8x8x16xf32>
    %20 = arith.subf %18, %19 : vector<2x8x8x16xf32>
    %21 = vector.shape_cast %20 : vector<2x8x8x16xf32> to vector<2x64x16xf32>
    %22 = arith.mulf %21, %21 : vector<2x64x16xf32>
    %cst_8 = arith.constant dense<0.000000e+00> : vector<2x64xf32>
    %23 = vector.multi_reduction <add>, %22, %cst_8 [2] : vector<2x64x16xf32> to vector<2x64xf32>
    %24 = math.sqrt %23 : vector<2x64xf32>
    %c0_9 = arith.constant 0 : index
    %c0_10 = arith.constant 0 : index
    %25 = vector.load %arg3[%c0_9, %c0_10] : memref<2x64xf32, #tpu.memory_space<vmem>>, vector<2x64xf32>
    tpu.vector_store %arg3[%c0_9, %c0_10], %24 {strides = array<i32>} : memref<2x64xf32, #tpu.memory_space<vmem>>, vector<2x64xf32>,
    return
  }
  func.func @transform_0(%arg0: i32) -> (i32, i32, i32) {
    %c0_i32 = arith.constant 0 : i32
    %c0_i32_0 = arith.constant 0 : i32
    %c0_i32_1 = arith.constant 0 : i32
    return %arg0, %c0_i32, %c0_i32_0 : i32, i32, i32
  }
  func.func @transform_1(%arg0: i32) -> (i32, i32) {
    %c0_i32 = arith.constant 0 : i32
    %c0_i32_0 = arith.constant 0 : i32
    %c0_i32_1 = arith.constant 0 : i32
    return %c0_i32, %c0_i32_0 : i32, i32
  }
  func.func @transform_2(%arg0: i32) -> (i32, i32) {
    %c0_i32 = arith.constant 0 : i32
    %c0_i32_0 = arith.constant 0 : i32
    return %arg0, %c0_i32 : i32, i32
  }
}

</mosaic_0001>

<llo_original>
// kernel: tpu_custom_call.1
$region0: #{tpu_custom_call.1}
  #allocation0 [shape = 'u32[]', space=smem, size = 0x4, offset = 0x4, fixed_abs, tag = 'smem constant byte address 0x4 - core index']
  #allocation1 [shape = 'u32[72,128]{1,0:T(1,128)}', space=vmem, size = 0x9000, scoped, tag = 'internal scratch']
  %s0 = inlined_call_operand.vmem [shape: f32[2,8,32], index: 0, kind: input, shape index: {}]
  %s1 = inlined_call_operand.vmem [shape: f32[32,16], index: 1, kind: input, shape index: {}]
  %s2 = inlined_call_operand.hbm [shape: f32[2,64], index: 2, kind: output, shape index: {}]
  %s3 = sld [smem:[#allocation0]]
  $region18: #{tpu_custom_call.1} parent=0
    _
  %s5 = ssub.s32 1, %s3
  %s6 = scalar_select 0, %s5, %s3
  $region1: #{tpu_custom_call.1} parent=0
    #allocation2 [shape = 'u8[1024]{0}', space=vmem, size = 0x400, scoped, tag = 'output window, operand 0, single buffered']
    #allocation3 [shape = 's32[1]{0}', space=sflag, size = 0x4, scoped, tag = 'scoped memory for tpu_custom_call.1']
    %7 = vsyncpa [#allocation3], 0
    // Predicated region
    $region2: #{tpu_custom_call.1} parent=1 // pred_check
      _
    $region3: #{tpu_custom_call.1} parent=1 // pred_check_branch
      %9 = sbr.rel (0) target = $region5
    $region4: #{tpu_custom_call.1} parent=1 // pred_region
      _
    $region5: #{tpu_custom_call.1} parent=1 // pred_fallthru
      _
    // Predicated region
    $region6: #{tpu_custom_call.1} parent=1 // pred_check
      _
    $region7: #{tpu_custom_call.1} parent=1 // pred_check_branch
      %11 = sbr.rel (0) target = $region9
    $region8: #{tpu_custom_call.1} parent=1 // pred_region
      _
    $region9: #{tpu_custom_call.1} parent=1 // pred_fallthru
      _
    %v12 = vld [vmem:[%s0] sm:$0xff]
    %v13 = vld [vmem:[%s0 + $0x8] sm:$0xff]
    %v14 = vand.u32 2147483647, %v12
    %v15 = vand.u32 2147483647, %v13
    %v16 = vadd.f32 %v14, 1.0
    %v17 = vadd.f32 %v15, 1.0
    %v18 = vlog2.pop %v16
    %v19 = vmul.f32 %v18, 0.6931472
    %v20 = vlog2.pop %v17
    %v21 = vmul.f32 %v20, 0.6931472
    %v22 = vld [vmem:[%s1] sm:$0xff]
    %v23 = vld [vmem:[%s1 + $0x8] sm:$0xff]
    %v24 = vld [vmem:[%s1 + $0x10] sm:$0xff]
    %v25 = vld [vmem:[%s1 + $0x18] sm:$0xff]
    %vm26 = vcmask 261120
    %v28 = vsel %vm26, %v19, 0
    %v31 = vsel %vm26, %v21, 0
    %33 = vmatpush.msra.mxu0 0.0
    %34 = vmatpush.msra.mxu0 0.0
    %35 = vmatpush.msra.mxu0 0.0
    %36 = vmatpush.msra.mxu0 0.0
    %37 = vmatpush.msra.mxu0 0.0
    %38 = vmatpush.msra.mxu0 0.0
    %39 = vmatpush.msra.mxu0 0.0
    %40 = vmatpush.msra.mxu0 0.0
    %41 = vmatpush.msra.mxu0 0.0
    %42 = vmatpush.msra.mxu0 0.0
    %43 = vmatpush.msra.mxu0 0.0
    %44 = vmatpush.msra.mxu0 0.0
    %45 = vmatpush.msra.mxu0 %v25
    %46 = vmatpush.msra.mxu0 %v24
    %47 = vmatpush.msra.mxu0 %v23
    %48 = vmatpush.msra.mxu0 %v22
    %49 = vmatmul.f32.gmra.mxu0 %v28
    %v50 = vpop.f32.mrf.mxu0
    %v51 = vadd.f32 0.0, %v50
    %52 = vmatmul.f32.gmra.mxu0 %v31
    %v53 = vpop.f32.mrf.mxu0
    %v54 = vadd.f32 0.0, %v53
    %55 = vdwg.mxu0
    %v56 = vsub.f32 0.0, %v51
    %v57 = vsub.f32 0.0, %v54
    %v58 = vmul.f32 %v56, 1.442695
    %v59 = vpow.pop %v58
    %v60 = vmul.f32 %v57, 1.442695
    %v61 = vpow.pop %v60
    %v62 = vadd.f32 %v59, 1.0
    %v63 = vadd.f32 %v61, 1.0
    %v64 = vrcp.pop %v62
    %v65 = vmul.f32 %v62, %v64
    %v66 = vsub.f32 1.0, %v65
    %v67 = vmul.f32 %v64, %v66
    %v68 = vadd.f32 %v64, %v67
    %vm69 = vweird.f32 %v62
    %vm70 = vweird.f32 %v64
    %vm71 = vmor %vm69, %vm70
    %v72 = vsel %vm71, %v64, %v68
    %v73 = vand.u32 2147483647, %v62
    %vm74 = vcmp.eq.f32.partialorder %v73, 8.507059e+37
    %v75 = vand.u32 %v62, 2147483648
    %v76 = vor.u32 1.1754944e-38, %v75
    %v77 = vsel %vm74, %v76, %v72
    %v78 = vmul.f32 1.0, %v77
    %v79 = vrcp.pop %v63
    %v80 = vmul.f32 %v63, %v79
    %v81 = vsub.f32 1.0, %v80
    %v82 = vmul.f32 %v79, %v81
    %v83 = vadd.f32 %v79, %v82
    %vm84 = vweird.f32 %v63
    %vm85 = vweird.f32 %v79
    %vm86 = vmor %vm84, %vm85
    %v87 = vsel %vm86, %v79, %v83
    %v88 = vand.u32 2147483647, %v63
    %vm89 = vcmp.eq.f32.partialorder %v88, 8.507059e+37
    %v90 = vand.u32 %v63, 2147483648
    %v91 = vor.u32 1.1754944e-38, %v90
    %v92 = vsel %vm89, %v91, %v87
    %v93 = vmul.f32 1.0, %v92
    %v96 = vrot.slane %v78, 1
    %v97 = vrot.slane %v78, 2
    %v98 = vrot.slane %v78, 3
    %v99 = vrot.slane %v78, 4
    %v100 = vrot.slane %v78, 5
    %v101 = vrot.slane %v78, 6
    %v102 = vrot.slane %v78, 7
    %v103 = vrot.slane %v93, 1
    %v104 = vrot.slane %v93, 2
    %v105 = vrot.slane %v93, 3
    %v106 = vrot.slane %v93, 4
    %v107 = vrot.slane %v93, 5
    %v108 = vrot.slane %v93, 6
    %v109 = vrot.slane %v93, 7
    %v110 = vperm.slane %v78, 0
    %v111 = vperm.slane %v96, 0
    %v112 = vperm.slane %v97, 0
    %v113 = vperm.slane %v98, 0
    %v114 = vperm.slane %v99, 0
    %v115 = vperm.slane %v100, 0
    %v116 = vperm.slane %v101, 0
    %v117 = vperm.slane %v102, 0
    %v118 = vperm.slane %v93, 0
    %v119 = vperm.slane %v103, 0
    %v120 = vperm.slane %v104, 0
    %v121 = vperm.slane %v105, 0
    %v122 = vperm.slane %v106, 0
    %v123 = vperm.slane %v107, 0
    %v124 = vperm.slane %v108, 0
    %v125 = vperm.slane %v109, 0
    %v142 = vsub.f32 %v110, %v78
    %v143 = vsub.f32 %v111, %v78
    %v144 = vsub.f32 %v112, %v78
    %v145 = vsub.f32 %v113, %v78
    %v146 = vsub.f32 %v114, %v78
    %v147 = vsub.f32 %v115, %v78
    %v148 = vsub.f32 %v116, %v78
    %v149 = vsub.f32 %v117, %v78
    %v150 = vsub.f32 %v118, %v93
    %v151 = vsub.f32 %v119, %v93
    %v152 = vsub.f32 %v120, %v93
    %v153 = vsub.f32 %v121, %v93
    %v154 = vsub.f32 %v122, %v93
    %v155 = vsub.f32 %v123, %v93
    %v156 = vsub.f32 %v124, %v93
    %v157 = vsub.f32 %v125, %v93
    %v158 = vmul.f32 %v142, %v142
    %v159 = vmul.f32 %v143, %v143
    %v160 = vmul.f32 %v144, %v144
    %v161 = vmul.f32 %v145, %v145
    %v162 = vmul.f32 %v146, %v146
    %v163 = vmul.f32 %v147, %v147
    %v164 = vmul.f32 %v148, %v148
    %v165 = vmul.f32 %v149, %v149
    %v166 = vmul.f32 %v150, %v150
    %v167 = vmul.f32 %v151, %v151
    %v168 = vmul.f32 %v152, %v152
    %v169 = vmul.f32 %v153, %v153
    %v170 = vmul.f32 %v154, %v154
    %v171 = vmul.f32 %v155, %v155
    %v172 = vmul.f32 %v156, %v156
    %v173 = vmul.f32 %v157, %v157
    %vm174 = vcmask 130048
    %v175 = vsel %vm174, %v158, 0.0
    %176 = vadd.xlane.f32.xlu0 %v175
    %v177 = vpop.xlane.xlu0 %176
    %v178 = vsel %vm174, %v159, 0.0
    %179 = vadd.xlane.f32.xlu0 %v178
    %v180 = vpop.xlane.xlu0 %179
    %v181 = vsel %vm174, %v160, 0.0
    %182 = vadd.xlane.f32.xlu0 %v181
    %v183 = vpop.xlane.xlu0 %182
    %v184 = vsel %vm174, %v161, 0.0
    %185 = vadd.xlane.f32.xlu0 %v184
    %v186 = vpop.xlane.xlu0 %185
    %v187 = vsel %vm174, %v162, 0.0
    %188 = vadd.xlane.f32.xlu0 %v187
    %v189 = vpop.xlane.xlu0 %188
    %v190 = vsel %vm174, %v163, 0.0
    %191 = vadd.xlane.f32.xlu0 %v190
    %v192 = vpop.xlane.xlu0 %191
    %v193 = vsel %vm174, %v164, 0.0
    %194 = vadd.xlane.f32.xlu0 %v193
    %v195 = vpop.xlane.xlu0 %194
    %v196 = vsel %vm174, %v165, 0.0
    %197 = vadd.xlane.f32.xlu0 %v196
    %v198 = vpop.xlane.xlu0 %197
    %v199 = vsel %vm174, %v166, 0.0
    %200 = vadd.xlane.f32.xlu0 %v199
    %v201 = vpop.xlane.xlu0 %200
    %v202 = vsel %vm174, %v167, 0.0
    %203 = vadd.xlane.f32.xlu0 %v202
    %v204 = vpop.xlane.xlu0 %203
    %v205 = vsel %vm174, %v168, 0.0
    %206 = vadd.xlane.f32.xlu0 %v205
    %v207 = vpop.xlane.xlu0 %206
    %v208 = vsel %vm174, %v169, 0.0
    %209 = vadd.xlane.f32.xlu0 %v208
    %v210 = vpop.xlane.xlu0 %209
    %v211 = vsel %vm174, %v170, 0.0
    %212 = vadd.xlane.f32.xlu0 %v211
    %v213 = vpop.xlane.xlu0 %212
    %v214 = vsel %vm174, %v171, 0.0
    %215 = vadd.xlane.f32.xlu0 %v214
    %v216 = vpop.xlane.xlu0 %215
    %v217 = vsel %vm174, %v172, 0.0
    %218 = vadd.xlane.f32.xlu0 %v217
    %v219 = vpop.xlane.xlu0 %218
    %v220 = vsel %vm174, %v173, 0.0
    %221 = vadd.xlane.f32.xlu0 %v220
    %v222 = vpop.xlane.xlu0 %221
    %v223 = vrsqrt.pop %v177
    %v224 = vmul.f32 %v223, %v177
    %v225 = vmul.f32 %v224, %v223
    %v226 = vmul.f32 0.5, %v225
    %v227 = vsub.f32 1.5, %v226
    %v228 = vmul.f32 %v223, %v227
    %v229 = vmul.f32 %v177, %v228
    %vm230 = vcmp.eq.f32.partialorder %v177, inf
    %v231 = vsel %vm230, %v177, %v229
    %vm232 = vcmp.eq.f32.partialorder %v177, 0.0
    %v233 = vand.u32 %v177, 2147483648
    %v234 = vsel %vm232, %v233, %v231
    %v235 = vrsqrt.pop %v180
    %v236 = vmul.f32 %v235, %v180
    %v237 = vmul.f32 %v236, %v235
    %v238 = vmul.f32 0.5, %v237
    %v239 = vsub.f32 1.5, %v238
    %v240 = vmul.f32 %v235, %v239
    %v241 = vmul.f32 %v180, %v240
    %vm242 = vcmp.eq.f32.partialorder %v180, inf
    %v243 = vsel %vm242, %v180, %v241
    %vm244 = vcmp.eq.f32.partialorder %v180, 0.0
    %v245 = vand.u32 %v180, 2147483648
    %v246 = vsel %vm244, %v245, %v243
    %v247 = vrsqrt.pop %v183
    %v248 = vmul.f32 %v247, %v183
    %v249 = vmul.f32 %v248, %v247
    %v250 = vmul.f32 0.5, %v249
    %v251 = vsub.f32 1.5, %v250
    %v252 = vmul.f32 %v247, %v251
    %v253 = vmul.f32 %v183, %v252
    %vm254 = vcmp.eq.f32.partialorder %v183, inf
    %v255 = vsel %vm254, %v183, %v253
    %vm256 = vcmp.eq.f32.partialorder %v183, 0.0
    %v257 = vand.u32 %v183, 2147483648
    %v258 = vsel %vm256, %v257, %v255
    %v259 = vrsqrt.pop %v186
    %v260 = vmul.f32 %v259, %v186
    %v261 = vmul.f32 %v260, %v259
    %v262 = vmul.f32 0.5, %v261
    %v263 = vsub.f32 1.5, %v262
    %v264 = vmul.f32 %v259, %v263
    %v265 = vmul.f32 %v186, %v264
    %vm266 = vcmp.eq.f32.partialorder %v186, inf
    %v267 = vsel %vm266, %v186, %v265
    %vm268 = vcmp.eq.f32.partialorder %v186, 0.0
    %v269 = vand.u32 %v186, 2147483648
    %v270 = vsel %vm268, %v269, %v267
    %v271 = vrsqrt.pop %v189
    %v272 = vmul.f32 %v271, %v189
    %v273 = vmul.f32 %v272, %v271
    %v274 = vmul.f32 0.5, %v273
    %v275 = vsub.f32 1.5, %v274
    %v276 = vmul.f32 %v271, %v275
    %v277 = vmul.f32 %v189, %v276
    %vm278 = vcmp.eq.f32.partialorder %v189, inf
    %v279 = vsel %vm278, %v189, %v277
    %vm280 = vcmp.eq.f32.partialorder %v189, 0.0
    %v281 = vand.u32 %v189, 2147483648
    %v282 = vsel %vm280, %v281, %v279
    %v283 = vrsqrt.pop %v192
    %v284 = vmul.f32 %v283, %v192
    %v285 = vmul.f32 %v284, %v283
    %v286 = vmul.f32 0.5, %v285
    %v287 = vsub.f32 1.5, %v286
    %v288 = vmul.f32 %v283, %v287
    %v289 = vmul.f32 %v192, %v288
    %vm290 = vcmp.eq.f32.partialorder %v192, inf
    %v291 = vsel %vm290, %v192, %v289
    %vm292 = vcmp.eq.f32.partialorder %v192, 0.0
    %v293 = vand.u32 %v192, 2147483648
    %v294 = vsel %vm292, %v293, %v291
    %v295 = vrsqrt.pop %v195
    %v296 = vmul.f32 %v295, %v195
    %v297 = vmul.f32 %v296, %v295
    %v298 = vmul.f32 0.5, %v297
    %v299 = vsub.f32 1.5, %v298
    %v300 = vmul.f32 %v295, %v299
    %v301 = vmul.f32 %v195, %v300
    %vm302 = vcmp.eq.f32.partialorder %v195, inf
    %v303 = vsel %vm302, %v195, %v301
    %vm304 = vcmp.eq.f32.partialorder %v195, 0.0
    %v305 = vand.u32 %v195, 2147483648
    %v306 = vsel %vm304, %v305, %v303
    %v307 = vrsqrt.pop %v198
    %v308 = vmul.f32 %v307, %v198
    %v309 = vmul.f32 %v308, %v307
    %v310 = vmul.f32 0.5, %v309
    %v311 = vsub.f32 1.5, %v310
    %v312 = vmul.f32 %v307, %v311
    %v313 = vmul.f32 %v198, %v312
    %vm314 = vcmp.eq.f32.partialorder %v198, inf
    %v315 = vsel %vm314, %v198, %v313
    %vm316 = vcmp.eq.f32.partialorder %v198, 0.0
    %v317 = vand.u32 %v198, 2147483648
    %v318 = vsel %vm316, %v317, %v315
    %v319 = vrsqrt.pop %v201
    %v320 = vmul.f32 %v319, %v201
    %v321 = vmul.f32 %v320, %v319
    %v322 = vmul.f32 0.5, %v321
    %v323 = vsub.f32 1.5, %v322
    %v324 = vmul.f32 %v319, %v323
    %v325 = vmul.f32 %v201, %v324
    %vm326 = vcmp.eq.f32.partialorder %v201, inf
    %v327 = vsel %vm326, %v201, %v325
    %vm328 = vcmp.eq.f32.partialorder %v201, 0.0
    %v329 = vand.u32 %v201, 2147483648
    %v330 = vsel %vm328, %v329, %v327
    %v331 = vrsqrt.pop %v204
    %v332 = vmul.f32 %v331, %v204
    %v333 = vmul.f32 %v332, %v331
    %v334 = vmul.f32 0.5, %v333
    %v335 = vsub.f32 1.5, %v334
    %v336 = vmul.f32 %v331, %v335
    %v337 = vmul.f32 %v204, %v336
    %vm338 = vcmp.eq.f32.partialorder %v204, inf
    %v339 = vsel %vm338, %v204, %v337
    %vm340 = vcmp.eq.f32.partialorder %v204, 0.0
    %v341 = vand.u32 %v204, 2147483648
    %v342 = vsel %vm340, %v341, %v339
    %v343 = vrsqrt.pop %v207
    %v344 = vmul.f32 %v343, %v207
    %v345 = vmul.f32 %v344, %v343
    %v346 = vmul.f32 0.5, %v345
    %v347 = vsub.f32 1.5, %v346
    %v348 = vmul.f32 %v343, %v347
    %v349 = vmul.f32 %v207, %v348
    %vm350 = vcmp.eq.f32.partialorder %v207, inf
    %v351 = vsel %vm350, %v207, %v349
    %vm352 = vcmp.eq.f32.partialorder %v207, 0.0
    %v353 = vand.u32 %v207, 2147483648
    %v354 = vsel %vm352, %v353, %v351
    %v355 = vrsqrt.pop %v210
    %v356 = vmul.f32 %v355, %v210
    %v357 = vmul.f32 %v356, %v355
    %v358 = vmul.f32 0.5, %v357
    %v359 = vsub.f32 1.5, %v358
    %v360 = vmul.f32 %v355, %v359
    %v361 = vmul.f32 %v210, %v360
    %vm362 = vcmp.eq.f32.partialorder %v210, inf
    %v363 = vsel %vm362, %v210, %v361
    %vm364 = vcmp.eq.f32.partialorder %v210, 0.0
    %v365 = vand.u32 %v210, 2147483648
    %v366 = vsel %vm364, %v365, %v363
    %v367 = vrsqrt.pop %v213
    %v368 = vmul.f32 %v367, %v213
    %v369 = vmul.f32 %v368, %v367
    %v370 = vmul.f32 0.5, %v369
    %v371 = vsub.f32 1.5, %v370
    %v372 = vmul.f32 %v367, %v371
    %v373 = vmul.f32 %v213, %v372
    %vm374 = vcmp.eq.f32.partialorder %v213, inf
    %v375 = vsel %vm374, %v213, %v373
    %vm376 = vcmp.eq.f32.partialorder %v213, 0.0
    %v377 = vand.u32 %v213, 2147483648
    %v378 = vsel %vm376, %v377, %v375
    %v379 = vrsqrt.pop %v216
    %v380 = vmul.f32 %v379, %v216
    %v381 = vmul.f32 %v380, %v379
    %v382 = vmul.f32 0.5, %v381
    %v383 = vsub.f32 1.5, %v382
    %v384 = vmul.f32 %v379, %v383
    %v385 = vmul.f32 %v216, %v384
    %vm386 = vcmp.eq.f32.partialorder %v216, inf
    %v387 = vsel %vm386, %v216, %v385
    %vm388 = vcmp.eq.f32.partialorder %v216, 0.0
    %v389 = vand.u32 %v216, 2147483648
    %v390 = vsel %vm388, %v389, %v387
    %v391 = vrsqrt.pop %v219
    %v392 = vmul.f32 %v391, %v219
    %v393 = vmul.f32 %v392, %v391
    %v394 = vmul.f32 0.5, %v393
    %v395 = vsub.f32 1.5, %v394
    %v396 = vmul.f32 %v391, %v395
    %v397 = vmul.f32 %v219, %v396
    %vm398 = vcmp.eq.f32.partialorder %v219, inf
    %v399 = vsel %vm398, %v219, %v397
    %vm400 = vcmp.eq.f32.partialorder %v219, 0.0
    %v401 = vand.u32 %v219, 2147483648
    %v402 = vsel %vm400, %v401, %v399
    %v403 = vrsqrt.pop %v222
    %v404 = vmul.f32 %v403, %v222
    %v405 = vmul.f32 %v404, %v403
    %v406 = vmul.f32 0.5, %v405
    %v407 = vsub.f32 1.5, %v406
    %v408 = vmul.f32 %v403, %v407
    %v409 = vmul.f32 %v222, %v408
    %vm410 = vcmp.eq.f32.partialorder %v222, inf
    %v411 = vsel %vm410, %v222, %v409
    %vm412 = vcmp.eq.f32.partialorder %v222, 0.0
    %v413 = vand.u32 %v222, 2147483648
    %v414 = vsel %vm412, %v413, %v411
    %v431 = vlaneseq
    %v432 = vand.u32 %v431, 127
    %v433 = vperm.slane %v234, %v432
    %v434 = vadd.s32 %v432, 4294967288
    %v435 = vperm.slane %v246, %v434
    %vm436 = vcmask 130112
    %v437 = vsel %vm436, %v435, %v433
    %v438 = vadd.s32 %v432, 4294967280
    %v439 = vperm.slane %v258, %v438
    %vm440 = vcmask 195712
    %v441 = vsel %vm440, %v439, %v437
    %v442 = vadd.s32 %v432, 4294967272
    %v443 = vperm.slane %v270, %v442
    %vm444 = vcmask 261312
    %v445 = vsel %vm444, %v443, %v441
    %v446 = vadd.s32 %v432, 4294967264
    %v447 = vperm.slane %v282, %v446
    %vm448 = vcmask 326912
    %v449 = vsel %vm448, %v447, %v445
    %v450 = vadd.s32 %v432, 4294967256
    %v451 = vperm.slane %v294, %v450
    %vm452 = vcmask 392512
    %v453 = vsel %vm452, %v451, %v449
    %v454 = vadd.s32 %v432, 4294967248
    %v455 = vperm.slane %v306, %v454
    %vm456 = vcmask 458112
    %v457 = vsel %vm456, %v455, %v453
    %v458 = vadd.s32 %v432, 4294967240
    %v459 = vperm.slane %v318, %v458
    %vm460 = vcmask 523712
    %v461 = vsel %vm460, %v459, %v457
    %v462 = vperm.slane %v330, %v432
    %v463 = vperm.slane %v342, %v434
    %v464 = vsel %vm436, %v463, %v462
    %v465 = vperm.slane %v354, %v438
    %v466 = vsel %vm440, %v465, %v464
    %v467 = vperm.slane %v366, %v442
    %v468 = vsel %vm444, %v467, %v466
    %v469 = vperm.slane %v378, %v446
    %v470 = vsel %vm448, %v469, %v468
    %v471 = vperm.slane %v390, %v450
    %v472 = vsel %vm452, %v471, %v470
    %v473 = vperm.slane %v402, %v454
    %v474 = vsel %vm456, %v473, %v472
    %v475 = vperm.slane %v414, %v458
    %v476 = vsel %vm460, %v475, %v474
    %vm477 = vcmask 1041409
    %v478 = vsel %vm477, %v476, %v461
    %vm480 = vcmask 517120
    %481 = vst.msk [vmem:[#allocation2] sm:$0x3] %vm480, %v478
    // Predicated region
    $region10: #{tpu_custom_call.1} parent=1 // pred_check
      _
    $region11: #{tpu_custom_call.1} parent=1 // pred_check_branch
      %483 = sbr.rel (0) target = $region13
    $region12: #{tpu_custom_call.1} parent=1 // pred_region
      %485 = vsyncadd [#allocation3], 0
      %s487 = sshll.u32 [#allocation2], 4
      %s488 = int_to_ptr.vmem [resolvable:$true] %s487
      %s489 = sshll.u32 %s2, 4
      %s490 = int_to_ptr.hbm [resolvable:$true] %s489
      %492 = dma.vmem_to_hbm [thread:$0]  %s488, 32, %s490, [#allocation3]
    $region13: #{tpu_custom_call.1} parent=1 // pred_fallthru
      _
    // Predicated region
    $region14: #{tpu_custom_call.1} parent=1 // pred_check
      _
    $region15: #{tpu_custom_call.1} parent=1 // pred_check_branch
      %494 = sbr.rel (0) target = $region17
    $region16: #{tpu_custom_call.1} parent=1 // pred_region
      %496 = dma.done [#allocation3], 32
    $region17: #{tpu_custom_call.1} parent=1 // pred_fallthru
      _
    %497 = vsyncpa [#allocation3], 1

</llo_original>
